<compile_context>
chip_gen: v6e
topology: v6e:2x2x1
jax: 0.10.0
libtpu: 0.0.40
codegen_flags: <defaults>
</compile_context>

<pallas_src>
import math
import functools

import jax
import jax.numpy as jnp
from jax import lax
from jax.experimental import pallas as pl
from jax.experimental.pallas import tpu as pltpu

_IN_EPS = 1e-5  # nn.InstanceNorm2d default


# --------------------------------------------------------------------------- #
# Kernels
# --------------------------------------------------------------------------- #
def _adain_fused_kernel(gamma_ref, beta_ref, x_ref, o_ref, *, eps, inv_hw,
                        low_precision_apply):
    """Fast path: full H*W of each channel tile resident in VMEM."""
    # gamma_ref/beta_ref : (1, TILE_C, 1)  fp32 per-channel affine params
    # x_ref/o_ref        : (1, TILE_C, HW) input/output slabs (HW on lanes)
    x = x_ref[0]                                        # (TILE_C, HW), io dtype
    xf = x.astype(jnp.float32)

    # One-pass statistics (sum & sum-of-squares share the single tile read);
    # biased variance like nn.InstanceNorm2d, clamped against fp32 cancellation.
    mean = jnp.sum(xf, axis=1, keepdims=True) * inv_hw           # (TILE_C, 1)
    mean_sq = jnp.sum(xf * xf, axis=1, keepdims=True) * inv_hw   # (TILE_C, 1)
    var = jnp.maximum(mean_sq - mean * mean, 0.0)
    inv_std = lax.rsqrt(var + eps)                               # (TILE_C, 1)

    gamma = gamma_ref[0]                                         # (TILE_C, 1)
    beta = beta_ref[0]
    scale = gamma * inv_std
    shift = beta - scale * mean      # fold the mean into the shift: no xc temp

    if low_precision_apply:
        # bf16 I/O on chips with a bf16 VALU: do the big MAD pass directly on x.
        o_ref[0] = (scale.astype(x.dtype) * x
                    + shift.astype(x.dtype)).astype(o_ref.dtype)
    else:
        o_ref[0] = (scale * xf + shift).astype(o_ref.dtype)


def _adain_stats_kernel(x_ref, sum_ref, sq_ref, *, hw_total, hw_tile, mask_tail):
    """Spatial fallback pass 1: accumulate per-channel sum / sum-of-squares."""
    si = pl.program_id(2)

    @pl.when(si == 0)
    def _():
        sum_ref[...] = jnp.zeros_like(sum_ref)
        sq_ref[...] = jnp.zeros_like(sq_ref)

    xf = x_ref[0].astype(jnp.float32)                    # (TILE_C, HW_TILE)
    if mask_tail:
        col = si * hw_tile + lax.broadcasted_iota(jnp.int32, xf.shape, 1)
        xf = jnp.where(col < hw_total, xf, 0.0)
    sum_ref[0] += jnp.sum(xf, axis=1, keepdims=True)
    sq_ref[0] += jnp.sum(xf * xf, axis=1, keepdims=True)


def _adain_apply_kernel(scale_ref, shift_ref, x_ref, o_ref):
    """Spatial fallback pass 2: out = scale * x + shift (pure streaming)."""
    o_ref[0] = (scale_ref[0] * x_ref[0].astype(jnp.float32)
                + shift_ref[0]).astype(o_ref.dtype)


# --------------------------------------------------------------------------- #
# Tiling / hardware helpers
# --------------------------------------------------------------------------- #
def _sublane_pack(itemsize):
    """Sublane packing factor: 8 for f32, 16 for bf16/f16, 32 for int8/fp8."""
    return max(8, 32 // int(itemsize))


def _tpu_generation_info():
    """(vmem_capacity_bytes, has_bf16_valu) with conservative fallbacks."""
    vmem_cap = 64 * 1024 * 1024              # v7x is the smallest of v5e/v6e/v7x
    try:
        info = pltpu.get_tpu_info()
        vmem_cap = int(getattr(info, "vmem_capacity_bytes", vmem_cap))
    except Exception:
        pass
    has_bf16_valu = True
    try:
        kind = jax.devices()[0].device_kind.lower()
        if "v5" in kind and ("lite" in kind or "v5e" in kind):
            has_bf16_valu = False            # v5e VPU has no bf16 VALU
    except Exception:
        pass
    return vmem_cap, has_bf16_valu


def _pick_channel_tile(c, hw, itemsize, budget, pack):
    """Largest sublane-aligned channel tile whose per-step VMEM footprint fits.

    Per-channel footprint = 2x(in) + 2x(out) pipeline buffers in the I/O dtype
    PLUS the fp32 working copies the kernel body materializes.  Returns None if
    even a minimal tile at full H*W does not fit (caller uses spatial tiling).
    """
    per_channel = 4 * hw * itemsize + 2 * hw * 4
    max_tile = budget // per_channel
    if c <= max_tile:
        return c
    if max_tile < pack:
        return None
    return int((max_tile // pack) * pack)


def _snap_to_divisor(c, tile_c, pack):
    """Prefer a pack-aligned tile that divides C (unmasked stores) when it is
    not much smaller than the budget-derived tile."""
    if tile_c >= c or c % tile_c == 0:
        return tile_c
    t = (tile_c // pack) * pack
    while t >= pack and 2 * t > tile_c:
        if c % t == 0:
            return t
        t -= pack
    return tile_c


# --------------------------------------------------------------------------- #
# Module
# --------------------------------------------------------------------------- #
class AdaptiveInstanceNormPallas:
    """JAX/Pallas equivalent of the PyTorch AdaptiveInstanceNorm module."""

    def __init__(self, in_channel, style_dim, key=None, eps=_IN_EPS):
        self.in_channel = in_channel
        self.style_dim = style_dim
        self.eps = eps

        if key is None:
            key = jax.random.PRNGKey(0)
        k1, k2, k3 = jax.random.split(key, 3)

        fan_in = style_dim                     # 1x1 conv -> fan_in = style_dim
        std = math.sqrt(2.0) / math.sqrt(fan_in)
        bound = 1.0 / math.sqrt(fan_in)

        # style2scale: kaiming-normal weight + uniform bias (Conv2d default bias).
        self.w_scale = std * jax.random.normal(k1, (in_channel, style_dim), jnp.float32)
        self.b_scale = jax.random.uniform(k2, (in_channel, 1), jnp.float32, -bound, bound)
        # style2bias: ConvGnLelu(weight_init_factor=0) -> zero weight, default bias.
        self.w_bias = jnp.zeros((in_channel, style_dim), jnp.float32)
        self.b_bias = jax.random.uniform(k3, (in_channel, 1), jnp.float32, -bound, bound)

    # ------------------------------------------------------------------ #
    def __call__(self, x, style, *, vmem_budget_bytes=None):
        # x: (b, C, H, W)   style: (b, S, 1, 1) or (b, S)
        b, c, h, w = x.shape
        if style.ndim == 4:
            sb, s_dim, sh, sw = style.shape
            # TODO(synk): per-pixel style maps (Hs, Ws > 1) are not supported; AdaIN
            # in this codebase always feeds a (b, style_dim, 1, 1) latent.
            assert sh == 1 and sw == 1
            style2 = style.reshape(sb, s_dim)
        else:
            style2 = style
        style2 = style2.astype(jnp.float32)

        # Tiny (b,S)@(S,C) 1x1 "convs" computed once in the wrapper: far too
        # skinny for the MXU, and computing them here removes the per-grid-step
        # weight re-DMA the kernel would otherwise pay.
        gamma3 = (style2 @ self.w_scale.T + self.b_scale.reshape(1, -1)).reshape(b, c, 1)
        beta3 = (style2 @ self.w_bias.T + self.b_bias.reshape(1, -1)).reshape(b, c, 1)

        hw = h * w
        x3 = x.reshape(b, c, hw)               # lane-dense: HW on the last axis
        itemsize = int(jnp.dtype(x.dtype).itemsize)
        pack = _sublane_pack(itemsize)

        vmem_cap, has_bf16_valu = _tpu_generation_info()
        budget = (vmem_cap * 3) // 5           # ~38 MiB on v7x, ~77 MiB on v5e/v6e
        if vmem_budget_bytes is not None:
            budget = int(vmem_budget_bytes)

        low_precision_apply = (x.dtype == jnp.bfloat16) and has_bf16_valu

        tile_c = _pick_channel_tile(c, hw, itemsize, budget, pack)
        if tile_c is not None:
            # Guarantee >= 2 grid steps when batch == 1 so both v7x TCs get work.
            if b == 1 and tile_c >= c and c > pack:
                half = (c + 1) // 2
                tile_c = max(pack, ((half + pack - 1) // pack) * pack)
            tile_c = _snap_to_divisor(c, tile_c, pack)
            out = self._fused_call(x3, gamma3, beta3, tile_c, hw, itemsize,
                                   vmem_cap, low_precision_apply)
        else:
            out = self._spatial_tiled_call(x3, gamma3, beta3, hw, itemsize,
                                           budget, vmem_cap, pack)

        return out.reshape(b, c, h, w)         # free reshape, no transpose

    # ------------------------------------------------------------------ #
    def _fused_call(self, x3, gamma3, beta3, tile_c, hw, itemsize, vmem_cap,
                    low_precision_apply):
        b, c, _ = x3.shape
        grid = (b, pl.cdiv(c, tile_c))

        # Declared VMEM: double-buffered in/out DMA buffers + fp32 body temps.
        est = (4 * tile_c * hw * itemsize + 3 * tile_c * hw * 4
               + 8 * c * 4 + (2 << 20))
        vmem_limit = int(min(vmem_cap - (8 << 20), max(est, 16 << 20)))

        cost = pl.CostEstimate(
            flops=int(b * c * hw * 5),
            transcendentals=int(b * c),
            bytes_accessed=int(2 * b * c * hw * itemsize + 2 * b * c * 4),
        )
        kern = functools.partial(_adain_fused_kernel, eps=self.eps,
                                 inv_hw=1.0 / float(hw),
                                 low_precision_apply=low_precision_apply)
        return pl.pallas_call(
            kern,
            out_shape=jax.ShapeDtypeStruct(x3.shape, x3.dtype),
            grid_spec=pltpu.PrefetchScalarGridSpec(
                num_scalar_prefetch=0,
                grid=grid,
                in_specs=[
                    pl.BlockSpec((1, tile_c, 1), lambda bi, ci: (bi, ci, 0)),   # gamma
                    pl.BlockSpec((1, tile_c, 1), lambda bi, ci: (bi, ci, 0)),   # beta
                    pl.BlockSpec((1, tile_c, hw), lambda bi, ci: (bi, ci, 0)),  # x
                ],
                out_specs=pl.BlockSpec((1, tile_c, hw), lambda bi, ci: (bi, ci, 0)),
            ),
            compiler_params=pltpu.CompilerParams(
                dimension_semantics=("parallel", "parallel"),
                vmem_limit_bytes=vmem_limit,
            ),
            cost_estimate=cost,
        )(gamma3, beta3, x3)

    # ------------------------------------------------------------------ #
    def _spatial_tiled_call(self, x3, gamma3, beta3, hw, itemsize, budget,
                            vmem_cap, pack):
        b, c, _ = x3.shape
        tile_c = min(pack, c)

        # Per-element footprint: double-buffered in/out DMA buffers + ~2 fp32
        # body temps.  Pick the largest 128-lane-aligned HW chunk that fits.
        per_elem = 4 * itemsize + 8
        hw_tile = max(128, ((budget // (tile_c * per_elem)) // 128) * 128)
        hw_tile = min(hw_tile, ((hw + 127) // 128) * 128)
        n_ct = pl.cdiv(c, tile_c)
        n_hw = pl.cdiv(hw, hw_tile)

        est = 4 * tile_c * hw_tile * itemsize + 2 * tile_c * hw_tile * 4 + (2 << 20)
        vmem_limit = int(min(vmem_cap - (8 << 20), max(est, 16 << 20)))

        # ---- Pass 1: per-channel sum / sum-of-squares over HW chunks -------
        stats_kern = functools.partial(
            _adain_stats_kernel, hw_total=hw, hw_tile=hw_tile,
            mask_tail=(hw % hw_tile != 0))
        sums, sqs = pl.pallas_call(
            stats_kern,
            out_shape=(jax.ShapeDtypeStruct((b, c, 1), jnp.float32),
                       jax.ShapeDtypeStruct((b, c, 1), jnp.float32)),
            grid_spec=pltpu.PrefetchScalarGridSpec(
                num_scalar_prefetch=0,
                grid=(b, n_ct, n_hw),
                in_specs=[pl.BlockSpec((1, tile_c, hw_tile),
                                       lambda bi, ci, si: (bi, ci, si))],
                out_specs=[pl.BlockSpec((1, tile_c, 1), lambda bi, ci, si: (bi, ci, 0)),
                           pl.BlockSpec((1, tile_c, 1), lambda bi, ci, si: (bi, ci, 0))],
            ),
            compiler_params=pltpu.CompilerParams(
                dimension_semantics=("parallel", "parallel", "arbitrary"),
                vmem_limit_bytes=vmem_limit,
            ),
        )(x3)

        # ---- Finalize scale/shift with tiny XLA ops (b*C elements) ---------
        inv_hw = 1.0 / float(hw)
        mean = sums * inv_hw
        var = jnp.maximum(sqs * inv_hw - mean * mean, 0.0)
        inv_std = lax.rsqrt(var + self.eps)
        scale = gamma3 * inv_std
        shift = beta3 - scale * mean

        # ---- Pass 2: streaming elementwise apply ----------------------------
        return pl.pallas_call(
            _adain_apply_kernel,
            out_shape=jax.ShapeDtypeStruct(x3.shape, x3.dtype),
            grid_spec=pltpu.PrefetchScalarGridSpec(
                num_scalar_prefetch=0,
                grid=(b, n_ct, n_hw),
                in_specs=[
                    pl.BlockSpec((1, tile_c, 1), lambda bi, ci, si: (bi, ci, 0)),
                    pl.BlockSpec((1, tile_c, 1), lambda bi, ci, si: (bi, ci, 0)),
                    pl.BlockSpec((1, tile_c, hw_tile), lambda bi, ci, si: (bi, ci, si)),
                ],
                out_specs=pl.BlockSpec((1, tile_c, hw_tile),
                                       lambda bi, ci, si: (bi, ci, si)),
            ),
            compiler_params=pltpu.CompilerParams(
                dimension_semantics=("parallel", "parallel", "parallel"),
                vmem_limit_bytes=vmem_limit,
            ),
        )(scale, shift, x3)


# --------------------------------------------------------------------------- #
# Validation
# --------------------------------------------------------------------------- #
def _reference(x, style, w_scale, b_scale, w_bias, b_bias, eps=_IN_EPS):
    """Pure-JAX replica of the PyTorch forward (for validation)."""
    b = x.shape[0]
    s = style.reshape(b, -1).astype(jnp.float32)
    gamma = s @ w_scale.T + b_scale.reshape(-1)           # (b, C)
    beta = s @ w_bias.T + b_bias.reshape(-1)              # (b, C)
    xf = x.astype(jnp.float32)
    mean = xf.mean(axis=(2, 3), keepdims=True)
    var = xf.var(axis=(2, 3), keepdims=True)              # biased, like InstanceNorm2d
    normed = (xf - mean) / jnp.sqrt(var + eps)
    out = gamma[:, :, None, None] * normed + beta[:, :, None, None]
    return out.astype(x.dtype)


if __name__ == "__main__":
    key = jax.random.PRNGKey(0)
    k_mod, k_x, k_s, k_wb = jax.random.split(key, 4)

    b, in_channel, style_dim = 2, 4, 8
    h = w = 16

    mod = AdaptiveInstanceNormPallas(in_channel, style_dim, key=k_mod)
    # The PyTorch module zero-initializes style2bias's conv weight
    # (weight_init_factor=0); override it with random values here purely so the
    # numerical check also exercises the beta path.
    mod.w_bias = 0.1 * jax.random.normal(k_wb, (in_channel, style_dim), jnp.float32)

    x = jax.random.normal(k_x, (b, in_channel, h, w), dtype=jnp.float32)
    style = jax.random.normal(k_s, (b, style_dim, 1, 1), dtype=jnp.float32)

    ref = _reference(x, style, mod.w_scale, mod.b_scale, mod.w_bias, mod.b_bias,
                     eps=mod.eps)

    # Fast fused path (default VMEM budget).
    out = jax.block_until_ready(mod(x, style))
    assert out.shape == (b, in_channel, h, w)
    assert jnp.allclose(out, ref, atol=1e-4, rtol=1e-4), (
        float(jnp.max(jnp.abs(out - ref))))

    # Spatial-tiling fallback (stats + apply kernels), forced on the same small
    # problem by shrinking the VMEM budget, validated against the same reference.
    out_fb = jax.block_until_ready(mod(x, style, vmem_budget_bytes=16 * 1024))
    assert jnp.allclose(out_fb, ref, atol=1e-4, rtol=1e-4), (
        float(jnp.max(jnp.abs(out_fb - ref))))

    print("KERNEL_OK")
</pallas_src>

<mosaic_0001>
module attributes {stable_mosaic.version = 11 : i64} {
  func.func @_adain_fused_kernel(%arg0: i32, %arg1: i32, %arg2: memref<1x4x1xf32, #tpu.memory_space<vmem>>, %arg3: memref<1x4x1xf32, #tpu.memory_space<vmem>>, %arg4: memref<1x4x256xf32, #tpu.memory_space<vmem>>, %arg5: memref<1x4x256xf32, #tpu.memory_space<vmem>>) attributes {dimension_semantics = [#tpu.dimension_semantics<parallel>, #tpu.dimension_semantics<parallel>], iteration_bounds = array<i64: 2, 1>, scalar_prefetch = 0 : i64, scratch_operands = 0 : i64, tpu.core_type = #tpu.core_type<tc>, window_params = [{transform_indices = @transform_0, window_bounds = array<i64: 1, 4, 1>}, {transform_indices = @transform_1, window_bounds = array<i64: 1, 4, 1>}, {transform_indices = @transform_2, window_bounds = array<i64: 1, 4, 256>}, {transform_indices = @transform_3, window_bounds = array<i64: 1, 4, 256>}]} {
    %c0 = arith.constant 0 : index
    %c0_0 = arith.constant 0 : index
    %c0_1 = arith.constant 0 : index
    %0 = vector.load %arg4[%c0, %c0_0, %c0_1] : memref<1x4x256xf32, #tpu.memory_space<vmem>>, vector<1x4x256xf32>
    %1 = vector.shape_cast %0 : vector<1x4x256xf32> to vector<4x256xf32>
    %cst = arith.constant dense<0.000000e+00> : vector<4xf32>
    %2 = vector.multi_reduction <add>, %1, %cst [1] : vector<4x256xf32> to vector<4xf32>
    %3 = vector.shape_cast %2 : vector<4xf32> to vector<4x1xf32>
    %cst_2 = arith.constant 3.906250e-03 : f32
    %4 = vector.broadcast %cst_2 : f32 to vector<4x1xf32>
    %5 = arith.mulf %3, %4 : vector<4x1xf32>
    %6 = arith.mulf %1, %1 : vector<4x256xf32>
    %cst_3 = arith.constant dense<0.000000e+00> : vector<4xf32>
    %7 = vector.multi_reduction <add>, %6, %cst_3 [1] : vector<4x256xf32> to vector<4xf32>
    %8 = vector.shape_cast %7 : vector<4xf32> to vector<4x1xf32>
    %cst_4 = arith.constant 3.906250e-03 : f32
    %9 = vector.broadcast %cst_4 : f32 to vector<4x1xf32>
    %10 = arith.mulf %8, %9 : vector<4x1xf32>
    %11 = arith.mulf %5, %5 : vector<4x1xf32>
    %12 = arith.subf %10, %11 : vector<4x1xf32>
    %cst_5 = arith.constant 0.000000e+00 : f32
    %13 = vector.broadcast %cst_5 : f32 to vector<4x1xf32>
    %14 = arith.maximumf %12, %13 : vector<4x1xf32>
    %cst_6 = arith.constant 9.99999974E-6 : f32
    %15 = vector.broadcast %cst_6 : f32 to vector<4x1xf32>
    %16 = arith.addf %14, %15 : vector<4x1xf32>
    %17 = math.rsqrt %16 : vector<4x1xf32>
    %c0_7 = arith.constant 0 : index
    %c0_8 = arith.constant 0 : index
    %c0_9 = arith.constant 0 : index
    %18 = vector.load %arg2[%c0_7, %c0_8, %c0_9] : memref<1x4x1xf32, #tpu.memory_space<vmem>>, vector<1x4x1xf32>
    %19 = vector.shape_cast %18 : vector<1x4x1xf32> to vector<4x1xf32>
    %c0_10 = arith.constant 0 : index
    %c0_11 = arith.constant 0 : index
    %c0_12 = arith.constant 0 : index
    %20 = vector.load %arg3[%c0_10, %c0_11, %c0_12] : memref<1x4x1xf32, #tpu.memory_space<vmem>>, vector<1x4x1xf32>
    %21 = vector.shape_cast %20 : vector<1x4x1xf32> to vector<4x1xf32>
    %22 = arith.mulf %19, %17 : vector<4x1xf32>
    %23 = arith.mulf %22, %5 : vector<4x1xf32>
    %24 = arith.subf %21, %23 : vector<4x1xf32>
    %25 = vector.broadcast %22 : vector<4x1xf32> to vector<4x256xf32>
    %26 = arith.mulf %25, %1 : vector<4x256xf32>
    %27 = vector.broadcast %24 : vector<4x1xf32> to vector<4x256xf32>
    %28 = arith.addf %26, %27 : vector<4x256xf32>
    %c0_13 = arith.constant 0 : index
    %c0_14 = arith.constant 0 : index
    %c0_15 = arith.constant 0 : index
    %29 = vector.load %arg5[%c0_13, %c0_14, %c0_15] : memref<1x4x256xf32, #tpu.memory_space<vmem>>, vector<1x4x256xf32>
    %30 = vector.shape_cast %29 : vector<1x4x256xf32> to vector<4x256xf32>
    %31 = vector.shape_cast %28 : vector<4x256xf32> to vector<1x4x256xf32>
    tpu.vector_store %arg5[%c0_13, %c0_14, %c0_15], %31 {strides = array<i32>} : memref<1x4x256xf32, #tpu.memory_space<vmem>>, vector<1x4x256xf32>,
    return
  }
  func.func @transform_0(%arg0: i32, %arg1: i32) -> (i32, i32, i32) {
    %c0_i32 = arith.constant 0 : i32
    %c0_i32_0 = arith.constant 0 : i32
    return %arg0, %arg1, %c0_i32 : i32, i32, i32
  }
  func.func @transform_1(%arg0: i32, %arg1: i32) -> (i32, i32, i32) {
    %c0_i32 = arith.constant 0 : i32
    %c0_i32_0 = arith.constant 0 : i32
    return %arg0, %arg1, %c0_i32 : i32, i32, i32
  }
  func.func @transform_2(%arg0: i32, %arg1: i32) -> (i32, i32, i32) {
    %c0_i32 = arith.constant 0 : i32
    %c0_i32_0 = arith.constant 0 : i32
    return %arg0, %arg1, %c0_i32 : i32, i32, i32
  }
  func.func @transform_3(%arg0: i32, %arg1: i32) -> (i32, i32, i32) {
    %c0_i32 = arith.constant 0 : i32
    %c0_i32_0 = arith.constant 0 : i32
    return %arg0, %arg1, %c0_i32 : i32, i32, i32
  }
}

</mosaic_0001>

<llo_original>
// kernel: tpu_custom_call.1
$region0: #{tpu_custom_call.1}
  #allocation0 [shape = 'u32[]', space=smem, size = 0x4, offset = 0x4, fixed_abs, tag = 'smem constant byte address 0x4 - core index']
  #allocation1 [shape = 'u32[144,128]{1,0:T(1,128)}', space=vmem, size = 0x12000, scoped, tag = 'internal scratch']
  %s0 = inlined_call_operand.vmem [shape: f32[2,4,1], index: 0, kind: input, shape index: {}]
  %s1 = inlined_call_operand.vmem [shape: f32[2,4,1], index: 1, kind: input, shape index: {}]
  %s2 = inlined_call_operand.vmem [shape: f32[2,4,256], index: 2, kind: input, shape index: {}]
  %s3 = inlined_call_operand.hbm [shape: f32[2,4,256], index: 3, kind: output, shape index: {}]
  %s4 = sld [smem:[#allocation0]]
  $region45: #{tpu_custom_call.1} parent=0
    _
  %s6 = ssub.s32 1, %s4
  %s7 = scalar_select 0, %s6, %s4
  $region1: #{tpu_custom_call.1} parent=0
    #allocation2 [shape = 'u8[8192]{0}', space=vmem, size = 0x2000, scoped, tag = 'output window, operand 0']
    #allocation3 [shape = 's32[2]{0}', space=sflag, size = 0x8, scoped, tag = 'scoped memory for tpu_custom_call.1']
    %8 = vsyncpa [#allocation3], 0
    %s9 = scalar_lea.sflag [#allocation3], 1
    %10 = vsyncpa %s9, 0
    loop: start=0, step=1, limit=4
    $region2: #{tpu_custom_call.1} parent=1 // loop_pre_header
      _
    $region3: #{tpu_custom_call.1} parent=1 // loop_header
      %s12 = sphi 0, %s16
      %p13 = scmp.ge.s32.totalorder %s12, 4
      %s19 = sphi 0, %s31
      %s20 = sphi 0, %s27
      %s21 = sphi 0, %s19
      %s22 = sphi 0, %s20
      %s23 = sphi 0, %s21
      %s24 = sphi 0, %s22
      %s36 = sphi 0, %s38
      %s39 = sphi 0, %s36
      %s40 = sphi 0, %s39
      %s56 = sphi 0, %s40
      %s64 = sphi 0, %s66
      %s67 = sphi 0, %s64
      %s68 = sphi 0, %s67
      %s84 = sphi 0, %s68
      %s92 = sphi 0, %s94
      %s95 = sphi 0, %s92
      %s96 = sphi 0, %s95
      %s112 = sphi 0, %s96
      %s120 = sphi 0, %s122
      %s123 = sphi 0, %s120
      %s124 = sphi 0, %s123
      %s140 = sphi 0, %s124
    $region4: #{tpu_custom_call.1} parent=1 // loop_header_branch
      %15 = sbr.rel (%p13) target = $region8
    $region5: #{tpu_custom_call.1} parent=1 // loop_body
      %s17 = ssub.s32 %s12, 1
      %s18 = ssub.s32 %s12, 2
      %s25 = sadd.s32 1, %s20
      %p26 = scmp.ge.s32.totalorder %s25, 1
      %s27 = scalar_select %p26, 0, %s25
      %s28 = sadd.s32 1, %s19
      %s29 = scalar_select %p26, %s28, %s19
      %p30 = scmp.ge.s32.totalorder %s29, 2
      %s31 = scalar_select %p30, 0, %s29
      %s32 = ssub.s32 %s19, %s31
      %s33 = ssub.s32 %s20, %s27
      %s34 = sor.u32 %s32, %s33
      %p35 = scmp.eq.s32.totalorder %s34, 0
      %s37 = sadd.s32 %s36, 1
      %s38 = scalar_select %p35, %s36, %s37
      %p41 = pneg %p35
      %p42 = scmp.eq.s32.totalorder %s12, 1
      %p43 = por %p41, %p42
      %p44 = scmp.ne.s32.totalorder %s36, %s39
      %p45 = scmp.eq.s32.totalorder %s12, 0
      %p46 = por %p44, %p45
      %p47 = scmp.ne.s32.totalorder %s36, %s39
      %p48 = scmp.eq.s32.totalorder %s17, 1
      %p49 = por %p47, %p48
      %p50 = scmp.ne.s32.totalorder %s39, %s40
      %p51 = scmp.eq.s32.totalorder %s17, 0
      %p52 = por %p50, %p51
      %p53 = scmp.ne.s32.totalorder %s39, %s40
      %p54 = scmp.eq.s32.totalorder %s18, 1
      %p55 = por %p53, %p54
      %p57 = scmp.ne.s32.totalorder %s40, %s56
      %p58 = scmp.eq.s32.totalorder %s18, 0
      %p59 = por %p57, %p58
      %s60 = ssub.s32 %s19, %s31
      %s61 = ssub.s32 %s20, %s27
      %s62 = sor.u32 %s60, %s61
      %p63 = scmp.eq.s32.totalorder %s62, 0
      %s65 = sadd.s32 %s64, 1
      %s66 = scalar_select %p63, %s64, %s65
      %p69 = pneg %p63
      %p70 = scmp.eq.s32.totalorder %s12, 1
      %p71 = por %p69, %p70
      %p72 = scmp.ne.s32.totalorder %s64, %s67
      %p73 = scmp.eq.s32.totalorder %s12, 0
      %p74 = por %p72, %p73
      %p75 = scmp.ne.s32.totalorder %s64, %s67
      %p76 = scmp.eq.s32.totalorder %s17, 1
      %p77 = por %p75, %p76
      %p78 = scmp.ne.s32.totalorder %s67, %s68
      %p79 = scmp.eq.s32.totalorder %s17, 0
      %p80 = por %p78, %p79
      %p81 = scmp.ne.s32.totalorder %s67, %s68
      %p82 = scmp.eq.s32.totalorder %s18, 1
      %p83 = por %p81, %p82
      %p85 = scmp.ne.s32.totalorder %s68, %s84
      %p86 = scmp.eq.s32.totalorder %s18, 0
      %p87 = por %p85, %p86
      %s88 = ssub.s32 %s19, %s31
      %s89 = ssub.s32 %s20, %s27
      %s90 = sor.u32 %s88, %s89
      %p91 = scmp.eq.s32.totalorder %s90, 0
      %s93 = sadd.s32 %s92, 1
      %s94 = scalar_select %p91, %s92, %s93
      %p97 = pneg %p91
      %p98 = scmp.eq.s32.totalorder %s12, 1
      %p99 = por %p97, %p98
      %p100 = scmp.ne.s32.totalorder %s92, %s95
      %p101 = scmp.eq.s32.totalorder %s12, 0
      %p102 = por %p100, %p101
      %p103 = scmp.ne.s32.totalorder %s92, %s95
      %p104 = scmp.eq.s32.totalorder %s17, 1
      %p105 = por %p103, %p104
      %p106 = scmp.ne.s32.totalorder %s95, %s96
      %p107 = scmp.eq.s32.totalorder %s17, 0
      %p108 = por %p106, %p107
      %p109 = scmp.ne.s32.totalorder %s95, %s96
      %p110 = scmp.eq.s32.totalorder %s18, 1
      %p111 = por %p109, %p110
      %p113 = scmp.ne.s32.totalorder %s96, %s112
      %p114 = scmp.eq.s32.totalorder %s18, 0
      %p115 = por %p113, %p114
      %s116 = ssub.s32 %s19, %s31
      %s117 = ssub.s32 %s20, %s27
      %s118 = sor.u32 %s116, %s117
      %p119 = scmp.eq.s32.totalorder %s118, 0
      %s121 = sadd.s32 %s120, 1
      %s122 = scalar_select %p119, %s120, %s121
      %p125 = pneg %p119
      %p126 = scmp.eq.s32.totalorder %s12, 1
      %p127 = por %p125, %p126
      %p128 = scmp.ne.s32.totalorder %s120, %s123
      %p129 = scmp.eq.s32.totalorder %s12, 0
      %p130 = por %p128, %p129
      %p131 = scmp.ne.s32.totalorder %s120, %s123
      %p132 = scmp.eq.s32.totalorder %s17, 1
      %p133 = por %p131, %p132
      %p134 = scmp.ne.s32.totalorder %s123, %s124
      %p135 = scmp.eq.s32.totalorder %s17, 0
      %p136 = por %p134, %p135
      %p137 = scmp.ne.s32.totalorder %s123, %s124
      %p138 = scmp.eq.s32.totalorder %s18, 1
      %p139 = por %p137, %p138
      %p141 = scmp.ne.s32.totalorder %s124, %s140
      %p142 = scmp.eq.s32.totalorder %s18, 0
      %p143 = por %p141, %p142
      %p144 = scmp.le.s32.totalorder 1, %s12
      %p145 = scmp.lt.s32.totalorder %s12, 3
      %p146 = pnand %p144, %p145
      %p147 = pneg %p146
      // Predicated region
      $region9: #{tpu_custom_call.1} parent=5 // pred_check
        _
      $region10: #{tpu_custom_call.1} parent=5 // pred_check_branch
        %149 = sbr.rel (%p146) target = $region12
      $region11: #{tpu_custom_call.1} parent=5 // pred_region
        %s150 = ssub.s32 %s12, 1
      $region12: #{tpu_custom_call.1} parent=5 // pred_fallthru
        _
      %p151 = scmp.lt.s32.totalorder %s12, 2
      // Predicated region
      $region13: #{tpu_custom_call.1} parent=5 // pred_check
        %p152 = pneg %p151
      $region14: #{tpu_custom_call.1} parent=5 // pred_check_branch
        %154 = sbr.rel (%p152) target = $region16
      $region15: #{tpu_custom_call.1} parent=5 // pred_region
        // Predicated region
        $region17: #{tpu_custom_call.1} parent=15 // pred_check
          %p155 = pneg %p46
        $region18: #{tpu_custom_call.1} parent=15 // pred_check_branch
          %157 = sbr.rel (%p155) target = $region20
        $region19: #{tpu_custom_call.1} parent=15 // pred_region
          %p158 = scmp.lt.s32.totalorder %s19, 1
          %s159 = scalar_select %p158, %s19, 1
          %p160 = scmp.lt.s32.totalorder %s20, 0
          %s161 = scalar_select %p160, %s20, 0
          %s162 = sadd.s32 %s161, %s159
          %s163 = smul.addr %s162, 4
          %s164 = scalar_lea.vmem %s0, %s163
        $region20: #{tpu_custom_call.1} parent=15 // pred_fallthru
          _
        // Predicated region
        $region21: #{tpu_custom_call.1} parent=15 // pred_check
          %p165 = pneg %p74
        $region22: #{tpu_custom_call.1} parent=15 // pred_check_branch
          %167 = sbr.rel (%p165) target = $region24
        $region23: #{tpu_custom_call.1} parent=15 // pred_region
          %p168 = scmp.lt.s32.totalorder %s19, 1
          %s169 = scalar_select %p168, %s19, 1
          %p170 = scmp.lt.s32.totalorder %s20, 0
          %s171 = scalar_select %p170, %s20, 0
          %s172 = sadd.s32 %s171, %s169
          %s173 = smul.addr %s172, 4
          %s174 = scalar_lea.vmem %s1, %s173
        $region24: #{tpu_custom_call.1} parent=15 // pred_fallthru
          _
        // Predicated region
        $region25: #{tpu_custom_call.1} parent=15 // pred_check
          %p175 = pneg %p102
        $region26: #{tpu_custom_call.1} parent=15 // pred_check_branch
          %177 = sbr.rel (%p175) target = $region28
        $region27: #{tpu_custom_call.1} parent=15 // pred_region
          %p178 = scmp.lt.s32.totalorder %s19, 1
          %s179 = scalar_select %p178, %s19, 1
          %p180 = scmp.lt.s32.totalorder %s20, 0
          %s181 = scalar_select %p180, %s20, 0
          %s182 = smul.addr %s181, 2
          %s183 = smul.addr %s179, 2
          %s184 = sadd.s32 %s182, %s183
          %s185 = smul.addr %s184, 4
          %s186 = scalar_lea.vmem %s2, %s185
        $region28: #{tpu_custom_call.1} parent=15 // pred_fallthru
          _
      $region16: #{tpu_custom_call.1} parent=5 // pred_fallthru
        _
      %p187 = scmp.le.s32.totalorder 1, %s12
      %p188 = scmp.lt.s32.totalorder %s12, 3
      %p189 = pnand %p187, %p188
      %p190 = pneg %p189
      // Predicated region
      $region29: #{tpu_custom_call.1} parent=5 // pred_check
        _
      $region30: #{tpu_custom_call.1} parent=5 // pred_check_branch
        %192 = sbr.rel (%p189) target = $region32
      $region31: #{tpu_custom_call.1} parent=5 // pred_region
        %s193 = ssub.s32 %s12, 1
        %p194 = scmp.lt.s32.totalorder %s21, 1
        %s195 = scalar_select %p194, %s21, 1
        %p196 = scmp.lt.s32.totalorder %s22, 0
        %s197 = scalar_select %p196, %s22, 0
        %s198 = sadd.s32 %s197, %s195
        %s199 = smul.addr %s198, 4
        %s200 = scalar_lea.vmem %s0, %s199
        %p201 = pneg %p52
        %p202 = pneg %p49
        %p203 = scmp.lt.s32.totalorder %s21, 1
        %s204 = scalar_select %p203, %s21, 1
        %p205 = scmp.lt.s32.totalorder %s22, 0
        %s206 = scalar_select %p205, %s22, 0
        %s207 = sadd.s32 %s206, %s204
        %s208 = smul.addr %s207, 4
        %s209 = scalar_lea.vmem %s1, %s208
        %p210 = pneg %p80
        %p211 = pneg %p77
        %p212 = scmp.lt.s32.totalorder %s21, 1
        %s213 = scalar_select %p212, %s21, 1
        %p214 = scmp.lt.s32.totalorder %s22, 0
        %s215 = scalar_select %p214, %s22, 0
        %s216 = smul.addr %s215, 2
        %s217 = smul.addr %s213, 2
        %s218 = sadd.s32 %s216, %s217
        %s219 = smul.addr %s218, 4
        %s220 = scalar_lea.vmem %s2, %s219
        %p221 = pneg %p108
        %p222 = pneg %p105
        %p223 = pneg %p136
        %p224 = pneg %p133
        %s225 = sand.u32 %s123, 1
        %s226 = scalar_lea.sflag [#allocation3], %s225
        %s227 = sand.u32 %s123, 1
        %s228 = smul.addr %s227, 8
        %s229 = scalar_lea.vmem [#allocation2], %s228
        %p230 = scmp.lt.s32.totalorder %s21, 1
        %s231 = scalar_select %p230, %s21, 1
        %p232 = scmp.lt.s32.totalorder %s22, 0
        %s233 = scalar_select %p232, %s22, 0
        %s234 = sadd.s32 %s233, %s231
        %s235 = smul.addr %s234, 4
        %s236 = scalar_lea.vmem %s0, %s235
        %p237 = scmp.lt.s32.totalorder %s21, 1
        %s238 = scalar_select %p237, %s21, 1
        %p239 = scmp.lt.s32.totalorder %s22, 0
        %s240 = scalar_select %p239, %s22, 0
        %s241 = sadd.s32 %s240, %s238
        %s242 = smul.addr %s241, 4
        %s243 = scalar_lea.vmem %s1, %s242
        %p244 = scmp.lt.s32.totalorder %s21, 1
        %s245 = scalar_select %p244, %s21, 1
        %p246 = scmp.lt.s32.totalorder %s22, 0
        %s247 = scalar_select %p246, %s22, 0
        %s248 = smul.addr %s247, 2
        %s249 = smul.addr %s245, 2
        %s250 = sadd.s32 %s248, %s249
        %s251 = smul.addr %s250, 4
        %s252 = scalar_lea.vmem %s2, %s251
        %v253 = vld [vmem:[%s252] sm:$0xff]
        %v255 = vcombine.high %v253, %v253
        %vm257 = vcmask 1043456
        %v258 = vsel %vm257, %v253, 0.0
        %v259 = vsel %vm257, %v255, 0.0
        %v260 = vadd.f32 %v258, %v259
        %261 = vadd.xlane.f32.xlu0 %v260
        %v262 = vpop.xlane.xlu0 %261
        %v263 = vmul.f32 %v262, 0.00390625
        %v264 = vmul.f32 %v253, %v253
        %v266 = vcombine.high %v264, %v264
        %v268 = vsel %vm257, %v264, 0.0
        %v269 = vsel %vm257, %v266, 0.0
        %v270 = vadd.f32 %v268, %v269
        %271 = vadd.xlane.f32.xlu0 %v270
        %v272 = vpop.xlane.xlu0 %271
        %v273 = vmul.f32 %v272, 0.00390625
        %v274 = vmul.f32 %v263, %v263
        %v275 = vsub.f32 %v273, %v274
        %v276 = vmax.f32 %v275, 0.0
        %v277 = vadd.f32 %v276, 1e-05
        %v278 = vrsqrt.pop %v277
        %v279 = vld [vmem:[%s236] sm:$0xf]
        %v280 = vld [vmem:[%s243] sm:$0xf]
        %v281 = vmul.f32 %v279, %v278
        %v282 = vmul.f32 %v281, %v263
        %v283 = vsub.f32 %v280, %v282
        %285 = vset.pattern.permute.xlu0 0
        %286 = vperm.xlu0 %285, %v281
        %v287 = vpop.permute.xlu0 %286
        %v289 = vmul.f32 %v287, %v253
        %v290 = vmul.f32 %v287, %v255
        %292 = vset.pattern.permute.xlu0 0
        %293 = vperm.xlu0 %292, %v283
        %v294 = vpop.permute.xlu0 %293
        %v296 = vadd.f32 %v289, %v294
        %v297 = vadd.f32 %v290, %v294
        %v300 = vcombine.low %v296, %v297
        %302 = vst [vmem:[%s229] sm:$0xff] %v300
        %s303 = sand.u32 %s123, 1
        %s304 = scalar_lea.sflag [#allocation3], %s303
        %s305 = sand.u32 %s123, 1
        %s306 = smul.addr %s305, 8
        %s307 = scalar_lea.vmem [#allocation2], %s306
        // Predicated region
        $region33: #{tpu_custom_call.1} parent=31 // pred_check
          %p308 = pneg %p133
        $region34: #{tpu_custom_call.1} parent=31 // pred_check_branch
          %310 = sbr.rel (%p308) target = $region36
        $region35: #{tpu_custom_call.1} parent=31 // pred_region
          %s312 = ssub.s32 128, 128
          %313 = vsyncadd %s304, %s312
          %s314 = smul.addr %s22, 2
          %s315 = smul.addr %s21, 2
          %s316 = sadd.s32 %s314, %s315
          %s317 = smul.addr %s316, 64
          %s318 = scalar_lea.hbm %s3, %s317
          %s320 = sshll.u32 %s307, 4
          %s321 = int_to_ptr.vmem [resolvable:$true] %s320
          %323 = dma.vmem_to_hbm [thread:$0]  %s321, 128, %s318, %s304
        $region36: #{tpu_custom_call.1} parent=31 // pred_fallthru
          _
      $region32: #{tpu_custom_call.1} parent=5 // pred_fallthru
        _
      %p324 = scmp.le.s32.totalorder 2, %s12
      // Predicated region
      $region37: #{tpu_custom_call.1} parent=5 // pred_check
        %p325 = pneg %p324
      $region38: #{tpu_custom_call.1} parent=5 // pred_check_branch
        %327 = sbr.rel (%p325) target = $region40
      $region39: #{tpu_custom_call.1} parent=5 // pred_region
        %s328 = ssub.s32 %s12, 2
        // Predicated region
        $region41: #{tpu_custom_call.1} parent=39 // pred_check
          %p329 = pneg %p139
        $region42: #{tpu_custom_call.1} parent=39 // pred_check_branch
          %331 = sbr.rel (%p329) target = $region44
        $region43: #{tpu_custom_call.1} parent=39 // pred_region
          %s332 = sand.u32 %s124, 1
          %s333 = scalar_lea.sflag [#allocation3], %s332
          %s334 = sand.u32 %s124, 1
          %s335 = smul.addr %s334, 8
          %s336 = scalar_lea.vmem [#allocation2], %s335
          %337 = dma.done %s333, 128
        $region44: #{tpu_custom_call.1} parent=39 // pred_fallthru
          _
      $region40: #{tpu_custom_call.1} parent=5 // pred_fallthru
        _
    $region6: #{tpu_custom_call.1} parent=1 // loop_footer
      %s16 = sadd.s32 1, %s12
    $region7: #{tpu_custom_call.1} parent=1 // loop_footer_branch
      %11 = sbr.rel target = $region3
    $region8: #{tpu_custom_call.1} parent=1 // loop_exit
      _
    %338 = vsyncpa [#allocation3], 1
    %s339 = scalar_lea.sflag [#allocation3], 1
    %340 = vsyncpa %s339, 1

</llo_original>
